<compile_context>
chip_gen: v5e
topology: v5e:2x2
jax: 0.10.0
libtpu: 0.0.40
codegen_flags: <defaults>
</compile_context>

<pallas_src>
import functools

import jax
import jax.numpy as jnp
from jax.experimental import pallas as pl
from jax.experimental.pallas import tpu as pltpu


def _gap_kernel(x_ref, o_ref, acc_ref, *, inv_hw, ts, chunk):
    """x_ref: (tr, ts) input block; o_ref: (tr, 1); acc_ref: (tr, 1) f32."""
    k = pl.program_id(1)

    @pl.when(k == 0)
    def _init():
        acc_ref[...] = jnp.zeros_like(acc_ref)

    # Sum this block along the lane axis with f32 accumulation.  Work on
    # static lane chunks so a sub-32-bit input never creates a full-block
    # f32 temporary (only a <= ~512 KiB chunk-sized one); for f32 inputs
    # chunk == ts and this is a single plain reduction.
    partial = None
    for start in range(0, ts, chunk):
        width = min(chunk, ts - start)
        piece = x_ref[:, start:start + width].astype(jnp.float32)
        psum = jnp.sum(piece, axis=-1, keepdims=True)        # (tr, 1) f32
        partial = psum if partial is None else partial + psum
    acc_ref[...] += partial

    @pl.when(k == pl.num_programs(1) - 1)
    def _finalize():
        o_ref[...] = (acc_ref[...] * inv_hw).astype(o_ref.dtype)


def _pick_tile(dim, unit, cap):
    """Largest divisor of `dim` that is a multiple of `unit` and <= max(unit, cap).

    The budget (`cap`) is soft: if it is smaller than one aligned tile, the
    minimum legal aligned tile (`unit`) is returned.  If `dim` is not a
    multiple of `unit`, the full extent is returned (always legal).
    """
    if dim % unit != 0:
        return dim
    cap = max(unit, min(dim, (cap // unit) * unit))
    for cand in range(cap, unit - 1, -unit):
        if dim % cand == 0:
            return cand
    return unit


def _vmem_budget():
    """Generation-aware (block_budget_bytes, vmem_capacity_bytes)."""
    cap = None
    try:
        info = pltpu.get_tpu_info()
        cap = getattr(info, "vmem_capacity_bytes", None)
    except Exception:  # pragma: no cover - conservative fallback off-TPU
        cap = None
    if not cap:
        cap = 64 * 1024 * 1024                 # assume the tightest (v7x-like)
    if cap >= 100 * 1024 * 1024:               # v5e / v6e: 128 MiB physical
        block = 12 * 1024 * 1024
    elif cap >= 48 * 1024 * 1024:              # v7x: 64 MiB physical
        block = 8 * 1024 * 1024
    else:
        block = 4 * 1024 * 1024
    return block, cap


def _plan_tiles(r, s, elem, budget):
    """Pick (row_tile, spatial_tile, padded_spatial_extent)."""
    full_s_rows = budget // (s * elem)         # rows per block if S untiled
    if r % 8 == 0 and full_s_rows >= 8:
        # Keep the full spatial extent (single reduction step); grow rows up
        # to the budget, but leave >= 2 row tiles for megacore when possible.
        cap = min(full_s_rows, r // 2 if r >= 16 else r)
        tr = _pick_tile(r, 8, cap)
        return tr, s, s
    if r % 8 != 0:
        if r * s * elem <= budget:
            return r, s, s                     # full-extent block, one step
        tr = r                                 # full-extent rows, tile spatial
    else:
        tr = 8
    # Spatial tiling needed.
    max_ts = max(128, (budget // (tr * elem)) // 128 * 128)
    if s % 128 == 0:
        ts = _pick_tile(s, 128, max_ts)
        return tr, ts, s
    # Non-128-multiple spatial extent: zero-pad up to a whole number of tiles
    # (zeros do not change the sum; the divisor stays the original H*W).
    ts = min(max_ts, ((s + 127) // 128) * 128)
    sp = ((s + ts - 1) // ts) * ts
    return tr, ts, sp


def global_avg_pool_2d(x, *, max_block_bytes=None):
    """Pallas GlobalAvgPool2d.  x: (N, C, H, W) -> (N, C)."""
    n, c, h, w = x.shape
    r, s = n * c, h * w
    x2 = x.reshape(r, s)                       # contiguous NCHW reshape: free
    elem = jnp.dtype(x.dtype).itemsize

    auto_block, vmem_cap = _vmem_budget()
    budget = int(max_block_bytes) if max_block_bytes else auto_block

    tr, ts, sp = _plan_tiles(r, s, elem, budget)
    if sp != s:
        x2 = jnp.pad(x2, ((0, 0), (0, sp - s)))

    # Lane-chunk size for in-kernel f32 accumulation: whole block for 32-bit
    # inputs; <= ~512 KiB f32 temporaries for narrower dtypes.
    if elem >= 4:
        chunk = ts
    else:
        chunk = max(128, min(ts, ((512 * 1024) // (tr * 4)) // 128 * 128))

    row_tiles, s_tiles = r // tr, sp // ts
    block_bytes = tr * ts * elem
    need = 2 * block_bytes + 2 * tr * elem + tr * 4 + (2 << 20)
    vmem_limit = int(min(max(need, 32 * 1024 * 1024), vmem_cap))

    out2 = pl.pallas_call(
        functools.partial(_gap_kernel, inv_hw=1.0 / float(s), ts=ts, chunk=chunk),
        out_shape=jax.ShapeDtypeStruct((r, 1), x.dtype),
        grid=(row_tiles, s_tiles),
        in_specs=[pl.BlockSpec((tr, ts), lambda i, k: (i, k))],
        out_specs=pl.BlockSpec((tr, 1), lambda i, k: (i, 0)),
        scratch_shapes=[pltpu.VMEM((tr, 1), jnp.float32)],
        compiler_params=pltpu.CompilerParams(
            dimension_semantics=("parallel", "arbitrary"),
            vmem_limit_bytes=vmem_limit,
        ),
        cost_estimate=pl.CostEstimate(
            flops=r * s, transcendentals=0,
            bytes_accessed=r * s * elem + r * elem),
    )(x2)
    return out2.reshape(n, c)


def _reference(x):
    return jnp.mean(x.astype(jnp.float32), axis=(2, 3))


if __name__ == "__main__":
    # Primary small NCHW input consistent with the module's forward.
    x = jax.random.normal(jax.random.PRNGKey(0), (2, 4, 16, 16), dtype=jnp.float32)
    out = jax.block_until_ready(global_avg_pool_2d(x))
    assert out.shape == (2, 4), out.shape
    assert out.dtype == x.dtype
    assert jnp.allclose(out, _reference(x), atol=1e-5, rtol=1e-5), "mismatch"

    # Multi-step spatial reduction + multiple row tiles (forced tiny budget).
    x2 = jax.random.normal(jax.random.PRNGKey(1), (2, 8, 16, 16), dtype=jnp.float32)
    out2 = jax.block_until_ready(global_avg_pool_2d(x2, max_block_bytes=4096))
    assert jnp.allclose(out2, _reference(x2), atol=1e-5, rtol=1e-5), "mismatch (tiled)"

    # Rows not a multiple of 8 and spatial < 128 (full-extent blocks).
    x3 = jax.random.normal(jax.random.PRNGKey(2), (1, 6, 10, 10), dtype=jnp.float32)
    out3 = jax.block_until_ready(global_avg_pool_2d(x3))
    assert jnp.allclose(out3, _reference(x3), atol=1e-5, rtol=1e-5), "mismatch (odd R/S)"

    # Spatial tiling with H*W not a multiple of 128 (zero-pad fallback path).
    x4 = jax.random.normal(jax.random.PRNGKey(3), (1, 8, 20, 20), dtype=jnp.float32)
    out4 = jax.block_until_ready(global_avg_pool_2d(x4, max_block_bytes=2048))
    assert jnp.allclose(out4, _reference(x4), atol=1e-5, rtol=1e-5), "mismatch (padded)"

    # bf16 input: f32 accumulation without a full-block f32 temporary.
    x5 = jax.random.normal(jax.random.PRNGKey(4), (2, 16, 8, 8), dtype=jnp.bfloat16)
    out5 = jax.block_until_ready(global_avg_pool_2d(x5))
    assert out5.dtype == jnp.bfloat16
    assert jnp.allclose(out5.astype(jnp.float32), _reference(x5),
                        atol=1e-2, rtol=1e-2), "mismatch (bf16)"

    print("KERNEL_OK")
</pallas_src>

<mosaic_0001>
module attributes {stable_mosaic.version = 11 : i64} {
  func.func @_gap_kernel(%arg0: i32, %arg1: i32, %arg2: memref<8x256xf32, #tpu.memory_space<vmem>>, %arg3: memref<8x1xf32, #tpu.memory_space<vmem>>, %arg4: memref<8x1xf32, #tpu.memory_space<vmem>>) attributes {dimension_semantics = [#tpu.dimension_semantics<parallel>, #tpu.dimension_semantics<arbitrary>], iteration_bounds = array<i64: 1, 1>, scalar_prefetch = 0 : i64, scratch_operands = 1 : i64, tpu.core_type = #tpu.core_type<tc>, window_params = [{transform_indices = @transform_0, window_bounds = array<i64: 8, 256>}, {transform_indices = @transform_1, window_bounds = array<i64: 8, 1>}]} {
    %c0_i32 = arith.constant 0 : i32
    %0 = arith.cmpi eq, %arg1, %c0_i32 : i32
    %1 = arith.extui %0 : i1 to i32
    %c0_i32_0 = arith.constant 0 : i32
    %2 = arith.cmpi ne, %1, %c0_i32_0 : i32
    scf.if %2 {
      %cst_8 = arith.constant 0.000000e+00 : f32
      %12 = vector.broadcast %cst_8 : f32 to vector<8x1xf32>
      %c0_9 = arith.constant 0 : index
      %c0_10 = arith.constant 0 : index
      %13 = vector.load %arg4[%c0_9, %c0_10] : memref<8x1xf32, #tpu.memory_space<vmem>>, vector<8x1xf32>
      tpu.vector_store %arg4[%c0_9, %c0_10], %12 {strides = array<i32>} : memref<8x1xf32, #tpu.memory_space<vmem>>, vector<8x1xf32>,
    } else {
    }
    %c0 = arith.constant 0 : index
    %c0_1 = arith.constant 0 : index
    %3 = vector.load %arg2[%c0, %c0_1] : memref<8x256xf32, #tpu.memory_space<vmem>>, vector<8x256xf32>
    %cst = arith.constant dense<0.000000e+00> : vector<8xf32>
    %4 = vector.multi_reduction <add>, %3, %cst [1] : vector<8x256xf32> to vector<8xf32>
    %5 = vector.shape_cast %4 : vector<8xf32> to vector<8x1xf32>
    %c0_2 = arith.constant 0 : index
    %c0_3 = arith.constant 0 : index
    %6 = vector.load %arg4[%c0_2, %c0_3] : memref<8x1xf32, #tpu.memory_space<vmem>>, vector<8x1xf32>
    %7 = arith.addf %6, %5 : vector<8x1xf32>
    %c0_4 = arith.constant 0 : index
    %c0_5 = arith.constant 0 : index
    %8 = vector.load %arg4[%c0_4, %c0_5] : memref<8x1xf32, #tpu.memory_space<vmem>>, vector<8x1xf32>
    tpu.vector_store %arg4[%c0_4, %c0_5], %7 {strides = array<i32>} : memref<8x1xf32, #tpu.memory_space<vmem>>, vector<8x1xf32>,
    %c0_i32_6 = arith.constant 0 : i32
    %9 = arith.cmpi eq, %arg1, %c0_i32_6 : i32
    %10 = arith.extui %9 : i1 to i32
    %c0_i32_7 = arith.constant 0 : i32
    %11 = arith.cmpi ne, %10, %c0_i32_7 : i32
    scf.if %11 {
      %c0_8 = arith.constant 0 : index
      %c0_9 = arith.constant 0 : index
      %12 = vector.load %arg4[%c0_8, %c0_9] : memref<8x1xf32, #tpu.memory_space<vmem>>, vector<8x1xf32>
      %cst_10 = arith.constant 3.906250e-03 : f32
      %13 = vector.broadcast %cst_10 : f32 to vector<8x1xf32>
      %14 = arith.mulf %12, %13 : vector<8x1xf32>
      %c0_11 = arith.constant 0 : index
      %c0_12 = arith.constant 0 : index
      %15 = vector.load %arg3[%c0_11, %c0_12] : memref<8x1xf32, #tpu.memory_space<vmem>>, vector<8x1xf32>
      tpu.vector_store %arg3[%c0_11, %c0_12], %14 {strides = array<i32>} : memref<8x1xf32, #tpu.memory_space<vmem>>, vector<8x1xf32>,
    } else {
    }
    return
  }
  func.func @transform_0(%arg0: i32, %arg1: i32) -> (i32, i32) {
    %c0_i32 = arith.constant 0 : i32
    return %arg0, %arg1 : i32, i32
  }
  func.func @transform_1(%arg0: i32, %arg1: i32) -> (i32, i32) {
    %c0_i32 = arith.constant 0 : i32
    %c0_i32_0 = arith.constant 0 : i32
    return %arg0, %c0_i32 : i32, i32
  }
}

</mosaic_0001>

<llo_original>
// kernel: tpu_custom_call.1
$region0: #{tpu_custom_call.1}
  #allocation0 [shape = 'u32[]', space=smem, size = 0x4, offset = 0x4, fixed_abs, tag = 'smem constant byte address 0x4 - core index']
  #allocation1 [shape = 'u32[72,128]{1,0:T(1,128)}', space=vmem, size = 0x9000, scoped, tag = 'internal scratch']
  #allocation2 [shape = 'f32[8,1]{1,0:T(8,128)}', space=vmem, size = 0x1000, scoped, tag = 'scratch operand']
  %s0 = inlined_call_operand.hbm [shape: f32[8,256], index: 0, kind: input, shape index: {}]
  %s1 = inlined_call_operand.vmem [shape: f32[8,1], index: 1, kind: output, shape index: {}]
  %s2 = sld [smem:[#allocation0]]
  $region26: #{tpu_custom_call.1} parent=0
    _
  %s4 = ssub.s32 1, %s2
  %s5 = scalar_select 0, %s4, %s2
  $region1: #{tpu_custom_call.1} parent=0
    #allocation3 [shape = 'u8[8192]{0}', space=vmem, size = 0x2000, scoped, tag = 'input window, operand 0, single buffered']
    #allocation4 [shape = 's32[1]{0}', space=sflag, size = 0x4, scoped, tag = 'scoped memory for tpu_custom_call.1']
    %6 = vsyncpa [#allocation4], 0
    // Predicated region
    $region2: #{tpu_custom_call.1} parent=1 // pred_check
      _
    $region3: #{tpu_custom_call.1} parent=1 // pred_check_branch
      %8 = sbr.rel (0) target = $region5
    $region4: #{tpu_custom_call.1} parent=1 // pred_region
      %10 = vsyncadd [#allocation4], 0
      %s12 = sshll.u32 %s0, 4
      %s13 = int_to_ptr.hbm [resolvable:$true] %s12
      %s14 = sshll.u32 [#allocation3], 4
      %s15 = int_to_ptr.vmem [resolvable:$true] %s14
      %17 = dma.hbm_to_vmem [thread:$0]  %s13, 256, %s15, [#allocation4]
    $region5: #{tpu_custom_call.1} parent=1 // pred_fallthru
      _
    // Predicated region
    $region6: #{tpu_custom_call.1} parent=1 // pred_check
      _
    $region7: #{tpu_custom_call.1} parent=1 // pred_check_branch
      %19 = sbr.rel (0) target = $region9
    $region8: #{tpu_custom_call.1} parent=1 // pred_region
      %21 = dma.done [#allocation4], 256
    $region9: #{tpu_custom_call.1} parent=1 // pred_fallthru
      _
    %p22 = scmp.eq.s32.totalorder 0, 0
    // Predicated region
    $region10: #{tpu_custom_call.1} parent=1 // pred_check
      %p23 = pneg %p22
    $region11: #{tpu_custom_call.1} parent=1 // pred_check_branch
      %25 = sbr.rel (%p23) target = $region13
    $region12: #{tpu_custom_call.1} parent=1 // pred_region
      %vm26 = vcmask 7168
      %27 = vst.msk [vmem:[#allocation2] sm:$0xff] %vm26, 0.0
    $region13: #{tpu_custom_call.1} parent=1 // pred_fallthru
      _
    %v28 = vld [vmem:[#allocation3] sm:$0xff]
    %v29 = vld [vmem:[#allocation3 + $0x8] sm:$0xff]
    %v30 = vadd.f32 %v28, %v29
    %31 = vadd.xlane.f32.xlu0 %v30
    %v32 = vpop.xlane.xlu0 %31
    %v33 = vld [vmem:[#allocation2] sm:$0xff]
    %v34 = vadd.f32 %v33, %v32
    %vm35 = vcmask 7168
    %36 = vst.msk [vmem:[#allocation2] sm:$0xff] %vm35, %v34
    // Predicated region
    $region14: #{tpu_custom_call.1} parent=1 // pred_check
      %p37 = pneg %p22
    $region15: #{tpu_custom_call.1} parent=1 // pred_check_branch
      %39 = sbr.rel (%p37) target = $region17
    $region16: #{tpu_custom_call.1} parent=1 // pred_region
      %v40 = vld [vmem:[#allocation2] sm:$0xff]
      %v41 = vmul.f32 %v40, 0.00390625
      %42 = vst.msk [vmem:[%s1] sm:$0xff] %vm35, %v41
    $region17: #{tpu_custom_call.1} parent=1 // pred_fallthru
      _
    // Predicated region
    $region18: #{tpu_custom_call.1} parent=1 // pred_check
      _
    $region19: #{tpu_custom_call.1} parent=1 // pred_check_branch
      %44 = sbr.rel (0) target = $region21
    $region20: #{tpu_custom_call.1} parent=1 // pred_region
      _
    $region21: #{tpu_custom_call.1} parent=1 // pred_fallthru
      _
    // Predicated region
    $region22: #{tpu_custom_call.1} parent=1 // pred_check
      _
    $region23: #{tpu_custom_call.1} parent=1 // pred_check_branch
      %46 = sbr.rel (0) target = $region25
    $region24: #{tpu_custom_call.1} parent=1 // pred_region
      _
    $region25: #{tpu_custom_call.1} parent=1 // pred_fallthru
      _
    %47 = vsyncpa [#allocation4], 1

</llo_original>
